<compile_context>
chip_gen: v5e
topology: v5e:2x2
jax: 0.10.0
libtpu: 0.0.40
codegen_flags: <defaults>
</compile_context>

<pallas_src>
import functools

import jax
import jax.numpy as jnp
import numpy as np
from jax.experimental import pallas as pl
from jax.experimental.pallas import tpu as pltpu

# (Cin, Cout, padding) of the five Conv1d(kernel=2, stride=2) layers.
_LAYERS = ((32, 16, 0), (16, 8, 1), (8, 8, 1), (8, 4, 0), (4, 4, 0))
_C_IN, _C_OUT = 32, 4
_RF = 32          # composite receptive field of the five k=2/s=2 layers
_STRIDE = 32      # composite stride
_PAD_LEFT = 6     # composite left offset (0*1 + 1*2 + 1*4 + 0*8 + 0*16)
_K = _C_IN * _RF  # 1024 = contraction depth of the folded GEMM


def _out_len(L):
    lin = L
    for _, _, p in _LAYERS:
        lout = (lin + 2 * p - 2) // 2 + 1
        assert lout >= 1, f"input length {L} too short for Encode32"
        lin = lout
    return lin


def _window_starts(L, l_out):
    assert L >= _RF, f"need L >= {_RF}, got {L}"
    # Clamped 32-wide input window per output position.  Weight rows for
    # positions outside the true receptive field of out[t] are exactly zero
    # (receptive-field structure), so the clamp is lossless.
    return tuple(min(max(_STRIDE * t - _PAD_LEFT, 0), L - _RF)
                 for t in range(l_out))


# ---------------------------------------------------------------------------
# Exact layered reference (identical Conv1d semantics).  Also used once,
# offline, to fold the parameters.
# ---------------------------------------------------------------------------
def _ref_forward(x_ncl, params):
    x = x_ncl.astype(jnp.float32)
    for name, (_, _, p) in zip("abcde", _LAYERS):
        w = jnp.asarray(params["w" + name], jnp.float32)
        b = jnp.asarray(params["b" + name], jnp.float32)
        x = jax.lax.conv_general_dilated(
            x, w, window_strides=(2,), padding=[(p, p)],
            dimension_numbers=("NCH", "OIH", "NCH")) + b[None, :, None]
    return x


def pack_params(params, L):
    """One-time offline fold of the five linear Conv1d layers into a banded
    affine map (exact, including all padding / floor-drop boundary effects).

    Returns:
      w_eff: (L_out, 1024, 4)  per-output-position weights; row = c*32 + tap
      b_eff: (L_out, 4)        per-output-position bias
    """
    l_out = _out_len(L)
    starts = _window_starts(L, l_out)
    # Exact per-position bias (captures the intermediate zero-padding effects
    # that a naive bias composition would get wrong at the boundaries).
    b_full = _ref_forward(jnp.zeros((1, _C_IN, L), jnp.float32), params)[0]  # (4, L_out)
    # Exact effective weights via impulse probing (the map is affine).  This
    # is one-time O((32*L)^2) work outside the forward path; trivial for the
    # short sequence lengths this encoder targets.
    eye = jnp.eye(_C_IN * L, dtype=jnp.float32).reshape(_C_IN * L, _C_IN, L)
    cols = _ref_forward(eye, params) - b_full[None]                          # (32L, 4, L_out)
    a_full = cols.reshape(_C_IN, L, _C_OUT, l_out)                           # [c, j, n, t]
    w_eff = jnp.stack(
        [a_full[:, s:s + _RF, :, t].reshape(_K, _C_OUT)
         for t, s in enumerate(starts)], axis=0)                             # (L_out, 1024, 4)
    b_eff = jnp.transpose(b_full)                                            # (L_out, 4)
    return w_eff, b_eff


# ---------------------------------------------------------------------------
# Pallas kernel: batch-blocked, one K=1024 GEMM per output position.
# ---------------------------------------------------------------------------
def _pick_block(B, L):
    # Keep the double-buffered input block comfortably inside scoped VMEM on
    # every generation (v7x has only 64 MiB total), and prefer >= 2 grid steps
    # so dual-TensorCore parts can split the "parallel" batch axis.
    cap = max(1, min(B, 128, (4 << 20) // (_C_IN * L * 4)))
    divs = [d for d in range(1, cap + 1) if B % d == 0]
    bt = divs[-1]
    if bt == B and B > 1 and len(divs) > 1:
        bt = divs[-2]
    return bt


@functools.lru_cache(maxsize=None)
def _build_encode32(B, L, l_out, bt):
    starts = _window_starts(L, l_out)
    nblk = B // bt
    out_lanes = bt * l_out * _C_OUT

    def kernel(x_ref, w_ref, b_ref, o_ref):
        ys = []
        for t, s in enumerate(starts):                       # static, small
            patch = x_ref[:, :, s:s + _RF].reshape(bt, _K)   # (Bt, 1024)
            y = jnp.dot(patch, w_ref[t],
                        preferred_element_type=jnp.float32)  # MXU GEMM, N=4
            ys.append(y + b_ref[t:t + 1, :])                 # (Bt, 4)
        y_all = ys[0] if l_out == 1 else jnp.concatenate(ys, axis=1)
        o_ref[...] = y_all.reshape(1, out_lanes)             # lane-dense store

    return pl.pallas_call(
        kernel,
        out_shape=jax.ShapeDtypeStruct((nblk, 1, out_lanes), jnp.float32),
        grid=(nblk,),
        in_specs=[
            pl.BlockSpec((bt, _C_IN, L), lambda i: (i, 0, 0)),        # input block
            pl.BlockSpec((l_out, _K, _C_OUT), lambda i: (0, 0, 0)),   # resident W
            pl.BlockSpec((l_out, _C_OUT), lambda i: (0, 0)),          # resident b
        ],
        out_specs=pl.BlockSpec((None, 1, out_lanes), lambda i: (i, 0, 0)),
        compiler_params=pltpu.CompilerParams(
            dimension_semantics=("parallel",)),
    )


def encode32_forward(x_ncl, w_eff, b_eff):
    """x_ncl: (B, 32, L) float32, PyTorch NCL layout. Returns (B, 4, L_out)."""
    B, C, L = x_ncl.shape
    assert C == _C_IN
    l_out = _out_len(L)
    assert w_eff.shape == (l_out, _K, _C_OUT)
    assert b_eff.shape == (l_out, _C_OUT)
    bt = _pick_block(B, L)
    y = _build_encode32(B, L, l_out, bt)(
        x_ncl.astype(jnp.float32), w_eff, b_eff)    # (B//bt, 1, bt*l_out*4)
    y = y.reshape(B, l_out, _C_OUT)
    return jnp.transpose(y, (0, 2, 1))               # (B, 4, L_out) — tiny


# ---------------------------------------------------------------------------
if __name__ == "__main__":
    key = jax.random.PRNGKey(0)
    ks = jax.random.split(key, 11)

    # Deterministic synthetic parameters (shapes from Encode32.__init__).
    params = {
        "wa": 0.1 * jax.random.normal(ks[0], (16, 32, 2), dtype=jnp.float32),
        "ba": 0.1 * jax.random.normal(ks[1], (16,), dtype=jnp.float32),
        "wb": 0.1 * jax.random.normal(ks[2], (8, 16, 2), dtype=jnp.float32),
        "bb": 0.1 * jax.random.normal(ks[3], (8,), dtype=jnp.float32),
        "wc": 0.1 * jax.random.normal(ks[4], (8, 8, 2), dtype=jnp.float32),
        "bc": 0.1 * jax.random.normal(ks[5], (8,), dtype=jnp.float32),
        "wd": 0.1 * jax.random.normal(ks[6], (4, 8, 2), dtype=jnp.float32),
        "bd": 0.1 * jax.random.normal(ks[7], (4,), dtype=jnp.float32),
        "we": 0.1 * jax.random.normal(ks[8], (4, 4, 2), dtype=jnp.float32),
        "be": 0.1 * jax.random.normal(ks[9], (4,), dtype=jnp.float32),
    }

    # Small input consistent with the module: (batch=2, channels=32, length=64)
    # -> lengths 64 -> 32 -> 17 -> 9 -> 4 -> 2, output (2, 4, 2).
    B, L = 2, 64
    x = jax.random.normal(ks[10], (B, 32, L), dtype=jnp.float32)

    w_eff, b_eff = pack_params(params, L)          # one-time offline fold
    out = jax.jit(encode32_forward)(x, w_eff, b_eff)
    out = jax.block_until_ready(out)
    assert out.shape == (B, _C_OUT, _out_len(L)), out.shape

    ref = jax.block_until_ready(_ref_forward(x, params))
    np.testing.assert_allclose(np.asarray(out), np.asarray(ref),
                               atol=1e-4, rtol=1e-4)

    print("KERNEL_OK")
</pallas_src>

<mosaic_0001>
module attributes {stable_mosaic.version = 11 : i64} {
  func.func @kernel(%arg0: i32, %arg1: memref<1x32x64xf32, #tpu.memory_space<vmem>>, %arg2: memref<2x1024x4xf32, #tpu.memory_space<vmem>>, %arg3: memref<2x4xf32, #tpu.memory_space<vmem>>, %arg4: memref<1x1x8xf32, #tpu.memory_space<vmem>>) attributes {dimension_semantics = [#tpu.dimension_semantics<parallel>], iteration_bounds = array<i64: 2>, scalar_prefetch = 0 : i64, scratch_operands = 0 : i64, tpu.core_type = #tpu.core_type<tc>, window_params = [{transform_indices = @transform_0, window_bounds = array<i64: 1, 32, 64>}, {pipeline_mode = #tpu.pipeline_mode<synchronous>, transform_indices = @transform_1, window_bounds = array<i64: 2, 1024, 4>}, {pipeline_mode = #tpu.pipeline_mode<synchronous>, transform_indices = @transform_2, window_bounds = array<i64: 2, 4>}, {transform_indices = @transform_3, window_bounds = array<i64: 1, 1, 8>}]} {
    %c0 = arith.constant 0 : index
    %c0_0 = arith.constant 0 : index
    %c0_1 = arith.constant 0 : index
    %0 = vector.load %arg1[%c0, %c0_0, %c0_1] : memref<1x32x64xf32, #tpu.memory_space<vmem>>, vector<1x32x32xf32>
    %1 = vector.shape_cast %0 : vector<1x32x32xf32> to vector<1x1024xf32>
    %c0_2 = arith.constant 0 : index
    %c0_3 = arith.constant 0 : index
    %c0_4 = arith.constant 0 : index
    %2 = vector.load %arg2[%c0_2, %c0_3, %c0_4] : memref<2x1024x4xf32, #tpu.memory_space<vmem>>, vector<1x1024x4xf32>
    %3 = vector.shape_cast %2 : vector<1x1024x4xf32> to vector<1024x4xf32>
    %cst = arith.constant dense<0.000000e+00> : vector<1x4xf32>
    %4 = tpu.matmul %1, %3, %cst {dimension_numbers = #tpu.dot_dimension_numbers<[1], [0], [0], [1], [0, 0, 1, 1], [], []>} : vector<1x1024xf32>, vector<1024x4xf32>, vector<1x4xf32> -> vector<1x4xf32>
    %c0_5 = arith.constant 0 : index
    %c0_6 = arith.constant 0 : index
    %5 = vector.load %arg3[%c0_5, %c0_6] : memref<2x4xf32, #tpu.memory_space<vmem>>, vector<1x4xf32>
    %6 = arith.addf %4, %5 : vector<1x4xf32>
    %c0_7 = arith.constant 0 : index
    %c0_8 = arith.constant 0 : index
    %c26 = arith.constant 26 : index
    %7 = vector.load %arg1[%c0_7, %c0_8, %c26] : memref<1x32x64xf32, #tpu.memory_space<vmem>>, vector<1x32x32xf32>
    %8 = vector.shape_cast %7 : vector<1x32x32xf32> to vector<1x1024xf32>
    %c1 = arith.constant 1 : index
    %c0_9 = arith.constant 0 : index
    %c0_10 = arith.constant 0 : index
    %9 = vector.load %arg2[%c1, %c0_9, %c0_10] : memref<2x1024x4xf32, #tpu.memory_space<vmem>>, vector<1x1024x4xf32>
    %10 = vector.shape_cast %9 : vector<1x1024x4xf32> to vector<1024x4xf32>
    %cst_11 = arith.constant dense<0.000000e+00> : vector<1x4xf32>
    %11 = tpu.matmul %8, %10, %cst_11 {dimension_numbers = #tpu.dot_dimension_numbers<[1], [0], [0], [1], [0, 0, 1, 1], [], []>} : vector<1x1024xf32>, vector<1024x4xf32>, vector<1x4xf32> -> vector<1x4xf32>
    %c1_12 = arith.constant 1 : index
    %c0_13 = arith.constant 0 : index
    %12 = vector.load %arg3[%c1_12, %c0_13] : memref<2x4xf32, #tpu.memory_space<vmem>>, vector<1x4xf32>
    %13 = arith.addf %11, %12 : vector<1x4xf32>
    %14 = tpu.concatenate %6, %13 in 1 : vector<1x4xf32>, vector<1x4xf32> -> vector<1x8xf32>
    %c0_14 = arith.constant 0 : index
    %c0_15 = arith.constant 0 : index
    %c0_16 = arith.constant 0 : index
    %15 = vector.load %arg4[%c0_14, %c0_15, %c0_16] : memref<1x1x8xf32, #tpu.memory_space<vmem>>, vector<1x1x8xf32>
    %16 = vector.shape_cast %15 : vector<1x1x8xf32> to vector<1x8xf32>
    %17 = vector.shape_cast %14 : vector<1x8xf32> to vector<1x1x8xf32>
    tpu.vector_store %arg4[%c0_14, %c0_15, %c0_16], %17 {strides = array<i32>} : memref<1x1x8xf32, #tpu.memory_space<vmem>>, vector<1x1x8xf32>,
    return
  }
  func.func @transform_0(%arg0: i32) -> (i32, i32, i32) {
    %c0_i32 = arith.constant 0 : i32
    %c0_i32_0 = arith.constant 0 : i32
    %c0_i32_1 = arith.constant 0 : i32
    return %arg0, %c0_i32, %c0_i32_0 : i32, i32, i32
  }
  func.func @transform_1(%arg0: i32) -> (i32, i32, i32) {
    %c0_i32 = arith.constant 0 : i32
    %c0_i32_0 = arith.constant 0 : i32
    %c0_i32_1 = arith.constant 0 : i32
    %c0_i32_2 = arith.constant 0 : i32
    return %c0_i32, %c0_i32_0, %c0_i32_1 : i32, i32, i32
  }
  func.func @transform_2(%arg0: i32) -> (i32, i32) {
    %c0_i32 = arith.constant 0 : i32
    %c0_i32_0 = arith.constant 0 : i32
    %c0_i32_1 = arith.constant 0 : i32
    return %c0_i32, %c0_i32_0 : i32, i32
  }
  func.func @transform_3(%arg0: i32) -> (i32, i32, i32) {
    %c0_i32 = arith.constant 0 : i32
    %c0_i32_0 = arith.constant 0 : i32
    %c0_i32_1 = arith.constant 0 : i32
    return %arg0, %c0_i32, %c0_i32_0 : i32, i32, i32
  }
}

</mosaic_0001>

<llo_original>
// kernel: encode32_forward.1
$region0: #{encode32_forward.1}
  #allocation0 [shape = 'u32[]', space=smem, size = 0x4, offset = 0x4, fixed_abs, tag = 'smem constant byte address 0x4 - core index']
  #allocation1 [shape = 'u32[72,128]{1,0:T(1,128)}', space=vmem, size = 0x9000, scoped, tag = 'internal scratch']
  %s0 = inlined_call_operand.vmem [shape: f32[2,32,64], index: 0, kind: input, shape index: {}]
  %s1 = inlined_call_operand.vmem [shape: f32[2,1024,4], index: 1, kind: input, shape index: {}]
  %s2 = inlined_call_operand.vmem [shape: f32[2,4], index: 2, kind: input, shape index: {}]
  %s3 = inlined_call_operand.vmem [shape: f32[2,1,8], index: 3, kind: output, shape index: {}]
  %s4 = sld [smem:[#allocation0]]
  $region45: #{encode32_forward.1} parent=0
    _
  %s6 = ssub.s32 1, %s4
  %s7 = scalar_select 0, %s6, %s4
  loop: start=0, step=1, limit=4
  $region2: #{encode32_forward.1} parent=0 // loop_pre_header
    _
  $region3: #{encode32_forward.1} parent=0 // loop_header
    %s9 = sphi 0, %s13
    %p10 = scmp.ge.s32.totalorder %s9, 4
    %s19 = sphi 0, %s21
    %s22 = sphi 0, %s19
    %s23 = sphi 0, %s22
    %s39 = sphi 0, %s23
    %s43 = sphi 0, %s43
    %s45 = sphi 0, %s43
    %s46 = sphi 0, %s45
    %s60 = sphi 0, %s46
    %s64 = sphi 0, %s64
    %s66 = sphi 0, %s64
    %s67 = sphi 0, %s66
    %s81 = sphi 0, %s67
    %s87 = sphi 0, %s89
    %s90 = sphi 0, %s87
    %s91 = sphi 0, %s90
    %s107 = sphi 0, %s91
  $region4: #{encode32_forward.1} parent=0 // loop_header_branch
    %12 = sbr.rel (%p10) target = $region8
  $region5: #{encode32_forward.1} parent=0 // loop_body
    %s14 = ssub.s32 %s9, 1
    %s15 = ssub.s32 %s9, 2
    %s16 = sadd.s32 %s9, 1
    %s17 = ssub.s32 %s9, %s16
    %p18 = scmp.eq.s32.totalorder %s17, 0
    %s20 = sadd.s32 %s19, 1
    %s21 = scalar_select %p18, %s19, %s20
    %p24 = pneg %p18
    %p25 = scmp.eq.s32.totalorder %s9, 1
    %p26 = por %p24, %p25
    %p27 = scmp.ne.s32.totalorder %s19, %s22
    %p28 = scmp.eq.s32.totalorder %s9, 0
    %p29 = por %p27, %p28
    %p30 = scmp.ne.s32.totalorder %s19, %s22
    %p31 = scmp.eq.s32.totalorder %s14, 1
    %p32 = por %p30, %p31
    %p33 = scmp.ne.s32.totalorder %s22, %s23
    %p34 = scmp.eq.s32.totalorder %s14, 0
    %p35 = por %p33, %p34
    %p36 = scmp.ne.s32.totalorder %s22, %s23
    %p37 = scmp.eq.s32.totalorder %s15, 1
    %p38 = por %p36, %p37
    %p40 = scmp.ne.s32.totalorder %s23, %s39
    %p41 = scmp.eq.s32.totalorder %s15, 0
    %p42 = por %p40, %p41
    %s44 = sadd.s32 %s43, 1
    %p47 = scmp.eq.s32.totalorder %s9, 1
    %p48 = scmp.ne.s32.totalorder %s43, %s45
    %p49 = scmp.eq.s32.totalorder %s9, 0
    %p50 = por %p48, %p49
    %p51 = scmp.ne.s32.totalorder %s43, %s45
    %p52 = scmp.eq.s32.totalorder %s14, 1
    %p53 = por %p51, %p52
    %p54 = scmp.ne.s32.totalorder %s45, %s46
    %p55 = scmp.eq.s32.totalorder %s14, 0
    %p56 = por %p54, %p55
    %p57 = scmp.ne.s32.totalorder %s45, %s46
    %p58 = scmp.eq.s32.totalorder %s15, 1
    %p59 = por %p57, %p58
    %p61 = scmp.ne.s32.totalorder %s46, %s60
    %p62 = scmp.eq.s32.totalorder %s15, 0
    %p63 = por %p61, %p62
    %s65 = sadd.s32 %s64, 1
    %p68 = scmp.eq.s32.totalorder %s9, 1
    %p69 = scmp.ne.s32.totalorder %s64, %s66
    %p70 = scmp.eq.s32.totalorder %s9, 0
    %p71 = por %p69, %p70
    %p72 = scmp.ne.s32.totalorder %s64, %s66
    %p73 = scmp.eq.s32.totalorder %s14, 1
    %p74 = por %p72, %p73
    %p75 = scmp.ne.s32.totalorder %s66, %s67
    %p76 = scmp.eq.s32.totalorder %s14, 0
    %p77 = por %p75, %p76
    %p78 = scmp.ne.s32.totalorder %s66, %s67
    %p79 = scmp.eq.s32.totalorder %s15, 1
    %p80 = por %p78, %p79
    %p82 = scmp.ne.s32.totalorder %s67, %s81
    %p83 = scmp.eq.s32.totalorder %s15, 0
    %p84 = por %p82, %p83
    %s85 = ssub.s32 %s9, %s16
    %p86 = scmp.eq.s32.totalorder %s85, 0
    %s88 = sadd.s32 %s87, 1
    %s89 = scalar_select %p86, %s87, %s88
    %p92 = pneg %p86
    %p93 = scmp.eq.s32.totalorder %s9, 1
    %p94 = por %p92, %p93
    %p95 = scmp.ne.s32.totalorder %s87, %s90
    %p96 = scmp.eq.s32.totalorder %s9, 0
    %p97 = por %p95, %p96
    %p98 = scmp.ne.s32.totalorder %s87, %s90
    %p99 = scmp.eq.s32.totalorder %s14, 1
    %p100 = por %p98, %p99
    %p101 = scmp.ne.s32.totalorder %s90, %s91
    %p102 = scmp.eq.s32.totalorder %s14, 0
    %p103 = por %p101, %p102
    %p104 = scmp.ne.s32.totalorder %s90, %s91
    %p105 = scmp.eq.s32.totalorder %s15, 1
    %p106 = por %p104, %p105
    %p108 = scmp.ne.s32.totalorder %s91, %s107
    %p109 = scmp.eq.s32.totalorder %s15, 0
    %p110 = por %p108, %p109
    %p111 = scmp.le.s32.totalorder 1, %s9
    %p112 = scmp.lt.s32.totalorder %s9, 3
    %p113 = pnand %p111, %p112
    %p114 = pneg %p113
    // Predicated region
    $region9: #{encode32_forward.1} parent=5 // pred_check
      _
    $region10: #{encode32_forward.1} parent=5 // pred_check_branch
      %116 = sbr.rel (%p113) target = $region12
    $region11: #{encode32_forward.1} parent=5 // pred_region
      %s117 = ssub.s32 %s9, 1
      // Predicated region
      $region13: #{encode32_forward.1} parent=11 // pred_check
        %p118 = pneg %p56
      $region14: #{encode32_forward.1} parent=11 // pred_check_branch
        %120 = sbr.rel (%p118) target = $region16
      $region15: #{encode32_forward.1} parent=11 // pred_region
        _
      $region16: #{encode32_forward.1} parent=11 // pred_fallthru
        _
      // Predicated region
      $region17: #{encode32_forward.1} parent=11 // pred_check
        %p121 = pneg %p77
      $region18: #{encode32_forward.1} parent=11 // pred_check_branch
        %123 = sbr.rel (%p121) target = $region20
      $region19: #{encode32_forward.1} parent=11 // pred_region
        _
      $region20: #{encode32_forward.1} parent=11 // pred_fallthru
        _
    $region12: #{encode32_forward.1} parent=5 // pred_fallthru
      _
    %p124 = scmp.lt.s32.totalorder %s9, 2
    // Predicated region
    $region21: #{encode32_forward.1} parent=5 // pred_check
      %p125 = pneg %p124
    $region22: #{encode32_forward.1} parent=5 // pred_check_branch
      %127 = sbr.rel (%p125) target = $region24
    $region23: #{encode32_forward.1} parent=5 // pred_region
      // Predicated region
      $region25: #{encode32_forward.1} parent=23 // pred_check
        %p128 = pneg %p29
      $region26: #{encode32_forward.1} parent=23 // pred_check_branch
        %130 = sbr.rel (%p128) target = $region28
      $region27: #{encode32_forward.1} parent=23 // pred_region
        %p131 = scmp.lt.s32.totalorder %s9, 1
        %s132 = scalar_select %p131, %s9, 1
        %s133 = smul.addr %s132, 4
        %s134 = smul.addr %s133, 8
        %s135 = scalar_lea.vmem %s0, %s134
      $region28: #{encode32_forward.1} parent=23 // pred_fallthru
        _
    $region24: #{encode32_forward.1} parent=5 // pred_fallthru
      _
    %p136 = scmp.le.s32.totalorder 1, %s9
    %p137 = scmp.lt.s32.totalorder %s9, 3
    %p138 = pnand %p136, %p137
    %p139 = pneg %p138
    // Predicated region
    $region29: #{encode32_forward.1} parent=5 // pred_check
      _
    $region30: #{encode32_forward.1} parent=5 // pred_check_branch
      %141 = sbr.rel (%p138) target = $region32
    $region31: #{encode32_forward.1} parent=5 // pred_region
      %s142 = ssub.s32 %s9, 1
      %p143 = scmp.lt.s32.totalorder %s14, 1
      %s144 = scalar_select %p143, %s14, 1
      %s145 = smul.addr %s144, 4
      %s146 = smul.addr %s145, 8
      %s147 = scalar_lea.vmem %s0, %s146
      %p148 = pneg %p35
      %p149 = pneg %p32
      %p150 = pneg %p56
      %p151 = pneg %p53
      %p152 = pneg %p77
      %p153 = pneg %p74
      %p154 = pneg %p103
      %p155 = pneg %p100
      %p156 = scmp.lt.s32.totalorder %s14, 1
      %s157 = scalar_select %p156, %s14, 1
      %s158 = scalar_lea.vmem %s3, %s157
      %p159 = scmp.lt.s32.totalorder %s14, 1
      %s160 = scalar_select %p159, %s14, 1
      %s161 = smul.addr %s160, 4
      %s162 = smul.addr %s161, 8
      %s163 = scalar_lea.vmem %s0, %s162
      %p164 = scmp.lt.s32.totalorder %s14, 1
      %s165 = scalar_select %p164, %s14, 1
      %s166 = scalar_lea.vmem %s3, %s165
      %v167 = vld [vmem:[%s163] sm:$0xff]
      %v168 = vld [vmem:[%s163 + $0x8] sm:$0xff]
      %v169 = vld [vmem:[%s163 + $0x10] sm:$0xff]
      %v170 = vld [vmem:[%s163 + $0x18] sm:$0xff]
      %v171 = vrot.slane %v167, 4
      %vm172 = vcmask 1047556
      %v173 = vsel %vm172, 0.0, %v171
      %v175 = vunpack.c.l.s4 1983009808
      %v176 = vunpack.c.0.s8 %v175
      %v177 = vperm.slane %v167, %v176
      %v179 = vunpack.c.l.s4 1983009808
      %v180 = vunpack.c.0.s8 %v179
      %v181 = vperm.slane %v173, %v180
      %v182 = vrot.slane %v177, 4
      %v183 = vsel %vm172, 0.0, %v182
      %v185 = vunpack.c.l.s4 1934713408
      %v186 = vunpack.c.0.s8 %v185
      %v187 = vperm.slane %v177, %v186
      %v189 = vunpack.c.l.s4 1934713408
      %v190 = vunpack.c.0.s8 %v189
      %v191 = vperm.slane %v183, %v190
      %v192 = vrot.slane %v181, 4
      %v193 = vsel %vm172, 0.0, %v192
      %v195 = vunpack.c.l.s4 1934713408
      %v196 = vunpack.c.0.s8 %v195
      %v197 = vperm.slane %v181, %v196
      %v199 = vunpack.c.l.s4 1934713408
      %v200 = vunpack.c.0.s8 %v199
      %v201 = vperm.slane %v193, %v200
      %v202 = vrot.slane %v187, 4
      %v203 = vsel %vm172, 0.0, %v202
      %v204 = vrot.slane %v191, 4
      %v205 = vsel %vm172, 0.0, %v204
      %v206 = vrot.slane %v197, 4
      %v207 = vsel %vm172, 0.0, %v206
      %v208 = vrot.slane %v201, 4
      %v209 = vsel %vm172, 0.0, %v208
      %v210 = vrot.slane %v168, 4
      %v211 = vsel %vm172, 0.0, %v210
      %v213 = vunpack.c.l.s4 1983009808
      %v214 = vunpack.c.0.s8 %v213
      %v215 = vperm.slane %v168, %v214
      %v217 = vunpack.c.l.s4 1983009808
      %v218 = vunpack.c.0.s8 %v217
      %v219 = vperm.slane %v211, %v218
      %v220 = vrot.slane %v215, 4
      %v221 = vsel %vm172, 0.0, %v220
      %v223 = vunpack.c.l.s4 1934713408
      %v224 = vunpack.c.0.s8 %v223
      %v225 = vperm.slane %v215, %v224
      %v227 = vunpack.c.l.s4 1934713408
      %v228 = vunpack.c.0.s8 %v227
      %v229 = vperm.slane %v221, %v228
      %v230 = vrot.slane %v219, 4
      %v231 = vsel %vm172, 0.0, %v230
      %v233 = vunpack.c.l.s4 1934713408
      %v234 = vunpack.c.0.s8 %v233
      %v235 = vperm.slane %v219, %v234
      %v237 = vunpack.c.l.s4 1934713408
      %v238 = vunpack.c.0.s8 %v237
      %v239 = vperm.slane %v231, %v238
      %v240 = vrot.slane %v225, 4
      %v241 = vsel %vm172, 0.0, %v240
      %v242 = vrot.slane %v229, 4
      %v243 = vsel %vm172, 0.0, %v242
      %v244 = vrot.slane %v235, 4
      %v245 = vsel %vm172, 0.0, %v244
      %v246 = vrot.slane %v239, 4
      %v247 = vsel %vm172, 0.0, %v246
      %v248 = vrot.slane %v169, 4
      %v249 = vsel %vm172, 0.0, %v248
      %v251 = vunpack.c.l.s4 1983009808
      %v252 = vunpack.c.0.s8 %v251
      %v253 = vperm.slane %v169, %v252
      %v255 = vunpack.c.l.s4 1983009808
      %v256 = vunpack.c.0.s8 %v255
      %v257 = vperm.slane %v249, %v256
      %v258 = vrot.slane %v253, 4
      %v259 = vsel %vm172, 0.0, %v258
      %v261 = vunpack.c.l.s4 1934713408
      %v262 = vunpack.c.0.s8 %v261
      %v263 = vperm.slane %v253, %v262
      %v265 = vunpack.c.l.s4 1934713408
      %v266 = vunpack.c.0.s8 %v265
      %v267 = vperm.slane %v259, %v266
      %v268 = vrot.slane %v257, 4
      %v269 = vsel %vm172, 0.0, %v268
      %v271 = vunpack.c.l.s4 1934713408
      %v272 = vunpack.c.0.s8 %v271
      %v273 = vperm.slane %v257, %v272
      %v275 = vunpack.c.l.s4 1934713408
      %v276 = vunpack.c.0.s8 %v275
      %v277 = vperm.slane %v269, %v276
      %v278 = vrot.slane %v263, 4
      %v279 = vsel %vm172, 0.0, %v278
      %v280 = vrot.slane %v267, 4
      %v281 = vsel %vm172, 0.0, %v280
      %v282 = vrot.slane %v273, 4
      %v283 = vsel %vm172, 0.0, %v282
      %v284 = vrot.slane %v277, 4
      %v285 = vsel %vm172, 0.0, %v284
      %v286 = vrot.slane %v170, 4
      %v287 = vsel %vm172, 0.0, %v286
      %v289 = vunpack.c.l.s4 1983009808
      %v290 = vunpack.c.0.s8 %v289
      %v291 = vperm.slane %v170, %v290
      %v293 = vunpack.c.l.s4 1983009808
      %v294 = vunpack.c.0.s8 %v293
      %v295 = vperm.slane %v287, %v294
      %v296 = vrot.slane %v291, 4
      %v297 = vsel %vm172, 0.0, %v296
      %v299 = vunpack.c.l.s4 1934713408
      %v300 = vunpack.c.0.s8 %v299
      %v301 = vperm.slane %v291, %v300
      %v303 = vunpack.c.l.s4 1934713408
      %v304 = vunpack.c.0.s8 %v303
      %v305 = vperm.slane %v297, %v304
      %v306 = vrot.slane %v295, 4
      %v307 = vsel %vm172, 0.0, %v306
      %v309 = vunpack.c.l.s4 1934713408
      %v310 = vunpack.c.0.s8 %v309
      %v311 = vperm.slane %v295, %v310
      %v313 = vunpack.c.l.s4 1934713408
      %v314 = vunpack.c.0.s8 %v313
      %v315 = vperm.slane %v307, %v314
      %v316 = vrot.slane %v301, 4
      %v317 = vsel %vm172, 0.0, %v316
      %v318 = vrot.slane %v305, 4
      %v319 = vsel %vm172, 0.0, %v318
      %v320 = vrot.slane %v311, 4
      %v321 = vsel %vm172, 0.0, %v320
      %v322 = vrot.slane %v315, 4
      %v323 = vsel %vm172, 0.0, %v322
      %325 = vrot.lane.b32.xlu0 %v203, 32
      %v326 = vpop.permute.xlu0 %325
      %329 = vrot.lane.b32.xlu0 %v191, 64
      %v330 = vpop.permute.xlu0 %329
      %333 = vrot.lane.b32.xlu0 %v205, 96
      %v334 = vpop.permute.xlu0 %333
      %337 = vrot.lane.b32.xlu0 %v207, 32
      %v338 = vpop.permute.xlu0 %337
      %341 = vrot.lane.b32.xlu0 %v201, 64
      %v342 = vpop.permute.xlu0 %341
      %345 = vrot.lane.b32.xlu0 %v209, 96
      %v346 = vpop.permute.xlu0 %345
      %349 = vrot.lane.b32.xlu0 %v241, 32
      %v350 = vpop.permute.xlu0 %349
      %353 = vrot.lane.b32.xlu0 %v229, 64
      %v354 = vpop.permute.xlu0 %353
      %357 = vrot.lane.b32.xlu0 %v243, 96
      %v358 = vpop.permute.xlu0 %357
      %361 = vrot.lane.b32.xlu0 %v245, 32
      %v362 = vpop.permute.xlu0 %361
      %365 = vrot.lane.b32.xlu0 %v239, 64
      %v366 = vpop.permute.xlu0 %365
      %369 = vrot.lane.b32.xlu0 %v247, 96
      %v370 = vpop.permute.xlu0 %369
      %373 = vrot.lane.b32.xlu0 %v279, 32
      %v374 = vpop.permute.xlu0 %373
      %377 = vrot.lane.b32.xlu0 %v267, 64
      %v378 = vpop.permute.xlu0 %377
      %381 = vrot.lane.b32.xlu0 %v281, 96
      %v382 = vpop.permute.xlu0 %381
      %385 = vrot.lane.b32.xlu0 %v283, 32
      %v386 = vpop.permute.xlu0 %385
      %389 = vrot.lane.b32.xlu0 %v277, 64
      %v390 = vpop.permute.xlu0 %389
      %393 = vrot.lane.b32.xlu0 %v285, 96
      %v394 = vpop.permute.xlu0 %393
      %397 = vrot.lane.b32.xlu0 %v317, 32
      %v398 = vpop.permute.xlu0 %397
      %401 = vrot.lane.b32.xlu0 %v305, 64
      %v402 = vpop.permute.xlu0 %401
      %405 = vrot.lane.b32.xlu0 %v319, 96
      %v406 = vpop.permute.xlu0 %405
      %409 = vrot.lane.b32.xlu0 %v321, 32
      %v410 = vpop.permute.xlu0 %409
      %413 = vrot.lane.b32.xlu0 %v315, 64
      %v414 = vpop.permute.xlu0 %413
      %417 = vrot.lane.b32.xlu0 %v323, 96
      %v418 = vpop.permute.xlu0 %417
      %vm420 = vcmask 261120
      %v421 = vsel %vm420, %v187, %v326
      %vm422 = vcmask 523264
      %v423 = vsel %vm422, %v421, %v330
      %vm424 = vcmask 785408
      %v425 = vsel %vm424, %v423, %v334
      %v426 = vsel %vm420, %v197, %v338
      %v427 = vsel %vm422, %v426, %v342
      %v428 = vsel %vm424, %v427, %v346
      %v429 = vsel %vm420, %v225, %v350
      %v430 = vsel %vm422, %v429, %v354
      %v431 = vsel %vm424, %v430, %v358
      %v432 = vsel %vm420, %v235, %v362
      %v433 = vsel %vm422, %v432, %v366
      %v434 = vsel %vm424, %v433, %v370
      %v435 = vsel %vm420, %v263, %v374
      %v436 = vsel %vm422, %v435, %v378
      %v437 = vsel %vm424, %v436, %v382
      %v438 = vsel %vm420, %v273, %v386
      %v439 = vsel %vm422, %v438, %v390
      %v440 = vsel %vm424, %v439, %v394
      %v441 = vsel %vm420, %v301, %v398
      %v442 = vsel %vm422, %v441, %v402
      %v443 = vsel %vm424, %v442, %v406
      %v444 = vsel %vm420, %v311, %v410
      %v445 = vsel %vm422, %v444, %v414
      %v446 = vsel %vm424, %v445, %v418
      %v447 = vld [vmem:[%s1] sm:$0xff]
      %v448 = vld [vmem:[%s1 + $0x8] sm:$0xff]
      %v449 = vld [vmem:[%s1 + $0x10] sm:$0xff]
      %v450 = vld [vmem:[%s1 + $0x18] sm:$0xff]
      %v451 = vld [vmem:[%s1 + $0x20] sm:$0xff]
      %v452 = vld [vmem:[%s1 + $0x28] sm:$0xff]
      %v453 = vld [vmem:[%s1 + $0x30] sm:$0xff]
      %v454 = vld [vmem:[%s1 + $0x38] sm:$0xff]
      %v455 = vld [vmem:[%s1 + $0x40] sm:$0xff]
      %v456 = vld [vmem:[%s1 + $0x48] sm:$0xff]
      %v457 = vld [vmem:[%s1 + $0x50] sm:$0xff]
      %v458 = vld [vmem:[%s1 + $0x58] sm:$0xff]
      %v459 = vld [vmem:[%s1 + $0x60] sm:$0xff]
      %v460 = vld [vmem:[%s1 + $0x68] sm:$0xff]
      %v461 = vld [vmem:[%s1 + $0x70] sm:$0xff]
      %v462 = vld [vmem:[%s1 + $0x78] sm:$0xff]
      %v463 = vld [vmem:[%s1 + $0x80] sm:$0xff]
      %v464 = vld [vmem:[%s1 + $0x88] sm:$0xff]
      %v465 = vld [vmem:[%s1 + $0x90] sm:$0xff]
      %v466 = vld [vmem:[%s1 + $0x98] sm:$0xff]
      %v467 = vld [vmem:[%s1 + $0xa0] sm:$0xff]
      %v468 = vld [vmem:[%s1 + $0xa8] sm:$0xff]
      %v469 = vld [vmem:[%s1 + $0xb0] sm:$0xff]
      %v470 = vld [vmem:[%s1 + $0xb8] sm:$0xff]
      %v471 = vld [vmem:[%s1 + $0xc0] sm:$0xff]
      %v472 = vld [vmem:[%s1 + $0xc8] sm:$0xff]
      %v473 = vld [vmem:[%s1 + $0xd0] sm:$0xff]
      %v474 = vld [vmem:[%s1 + $0xd8] sm:$0xff]
      %v475 = vld [vmem:[%s1 + $0xe0] sm:$0xff]
      %v476 = vld [vmem:[%s1 + $0xe8] sm:$0xff]
      %v477 = vld [vmem:[%s1 + $0xf0] sm:$0xff]
      %v478 = vld [vmem:[%s1 + $0xf8] sm:$0xff]
      %v479 = vld [vmem:[%s1 + $0x100] sm:$0xff]
      %v480 = vld [vmem:[%s1 + $0x108] sm:$0xff]
      %v481 = vld [vmem:[%s1 + $0x110] sm:$0xff]
      %v482 = vld [vmem:[%s1 + $0x118] sm:$0xff]
      %v483 = vld [vmem:[%s1 + $0x120] sm:$0xff]
      %v484 = vld [vmem:[%s1 + $0x128] sm:$0xff]
      %v485 = vld [vmem:[%s1 + $0x130] sm:$0xff]
      %v486 = vld [vmem:[%s1 + $0x138] sm:$0xff]
      %v487 = vld [vmem:[%s1 + $0x140] sm:$0xff]
      %v488 = vld [vmem:[%s1 + $0x148] sm:$0xff]
      %v489 = vld [vmem:[%s1 + $0x150] sm:$0xff]
      %v490 = vld [vmem:[%s1 + $0x158] sm:$0xff]
      %v491 = vld [vmem:[%s1 + $0x160] sm:$0xff]
      %v492 = vld [vmem:[%s1 + $0x168] sm:$0xff]
      %v493 = vld [vmem:[%s1 + $0x170] sm:$0xff]
      %v494 = vld [vmem:[%s1 + $0x178] sm:$0xff]
      %v495 = vld [vmem:[%s1 + $0x180] sm:$0xff]
      %v496 = vld [vmem:[%s1 + $0x188] sm:$0xff]
      %v497 = vld [vmem:[%s1 + $0x190] sm:$0xff]
      %v498 = vld [vmem:[%s1 + $0x198] sm:$0xff]
      %v499 = vld [vmem:[%s1 + $0x1a0] sm:$0xff]
      %v500 = vld [vmem:[%s1 + $0x1a8] sm:$0xff]
      %v501 = vld [vmem:[%s1 + $0x1b0] sm:$0xff]
      %v502 = vld [vmem:[%s1 + $0x1b8] sm:$0xff]
      %v503 = vld [vmem:[%s1 + $0x1c0] sm:$0xff]
      %v504 = vld [vmem:[%s1 + $0x1c8] sm:$0xff]
      %v505 = vld [vmem:[%s1 + $0x1d0] sm:$0xff]
      %v506 = vld [vmem:[%s1 + $0x1d8] sm:$0xff]
      %v507 = vld [vmem:[%s1 + $0x1e0] sm:$0xff]
      %v508 = vld [vmem:[%s1 + $0x1e8] sm:$0xff]
      %v509 = vld [vmem:[%s1 + $0x1f0] sm:$0xff]
      %v510 = vld [vmem:[%s1 + $0x1f8] sm:$0xff]
      %v511 = vld [vmem:[%s1 + $0x200] sm:$0xff]
      %v512 = vld [vmem:[%s1 + $0x208] sm:$0xff]
      %v513 = vld [vmem:[%s1 + $0x210] sm:$0xff]
      %v514 = vld [vmem:[%s1 + $0x218] sm:$0xff]
      %v515 = vld [vmem:[%s1 + $0x220] sm:$0xff]
      %v516 = vld [vmem:[%s1 + $0x228] sm:$0xff]
      %v517 = vld [vmem:[%s1 + $0x230] sm:$0xff]
      %v518 = vld [vmem:[%s1 + $0x238] sm:$0xff]
      %v519 = vld [vmem:[%s1 + $0x240] sm:$0xff]
      %v520 = vld [vmem:[%s1 + $0x248] sm:$0xff]
      %v521 = vld [vmem:[%s1 + $0x250] sm:$0xff]
      %v522 = vld [vmem:[%s1 + $0x258] sm:$0xff]
      %v523 = vld [vmem:[%s1 + $0x260] sm:$0xff]
      %v524 = vld [vmem:[%s1 + $0x268] sm:$0xff]
      %v525 = vld [vmem:[%s1 + $0x270] sm:$0xff]
      %v526 = vld [vmem:[%s1 + $0x278] sm:$0xff]
      %v527 = vld [vmem:[%s1 + $0x280] sm:$0xff]
      %v528 = vld [vmem:[%s1 + $0x288] sm:$0xff]
      %v529 = vld [vmem:[%s1 + $0x290] sm:$0xff]
      %v530 = vld [vmem:[%s1 + $0x298] sm:$0xff]
      %v531 = vld [vmem:[%s1 + $0x2a0] sm:$0xff]
      %v532 = vld [vmem:[%s1 + $0x2a8] sm:$0xff]
      %v533 = vld [vmem:[%s1 + $0x2b0] sm:$0xff]
      %v534 = vld [vmem:[%s1 + $0x2b8] sm:$0xff]
      %v535 = vld [vmem:[%s1 + $0x2c0] sm:$0xff]
      %v536 = vld [vmem:[%s1 + $0x2c8] sm:$0xff]
      %v537 = vld [vmem:[%s1 + $0x2d0] sm:$0xff]
      %v538 = vld [vmem:[%s1 + $0x2d8] sm:$0xff]
      %v539 = vld [vmem:[%s1 + $0x2e0] sm:$0xff]
      %v540 = vld [vmem:[%s1 + $0x2e8] sm:$0xff]
      %v541 = vld [vmem:[%s1 + $0x2f0] sm:$0xff]
      %v542 = vld [vmem:[%s1 + $0x2f8] sm:$0xff]
      %v543 = vld [vmem:[%s1 + $0x300] sm:$0xff]
      %v544 = vld [vmem:[%s1 + $0x308] sm:$0xff]
      %v545 = vld [vmem:[%s1 + $0x310] sm:$0xff]
      %v546 = vld [vmem:[%s1 + $0x318] sm:$0xff]
      %v547 = vld [vmem:[%s1 + $0x320] sm:$0xff]
      %v548 = vld [vmem:[%s1 + $0x328] sm:$0xff]
      %v549 = vld [vmem:[%s1 + $0x330] sm:$0xff]
      %v550 = vld [vmem:[%s1 + $0x338] sm:$0xff]
      %v551 = vld [vmem:[%s1 + $0x340] sm:$0xff]
      %v552 = vld [vmem:[%s1 + $0x348] sm:$0xff]
      %v553 = vld [vmem:[%s1 + $0x350] sm:$0xff]
      %v554 = vld [vmem:[%s1 + $0x358] sm:$0xff]
      %v555 = vld [vmem:[%s1 + $0x360] sm:$0xff]
      %v556 = vld [vmem:[%s1 + $0x368] sm:$0xff]
      %v557 = vld [vmem:[%s1 + $0x370] sm:$0xff]
      %v558 = vld [vmem:[%s1 + $0x378] sm:$0xff]
      %v559 = vld [vmem:[%s1 + $0x380] sm:$0xff]
      %v560 = vld [vmem:[%s1 + $0x388] sm:$0xff]
      %v561 = vld [vmem:[%s1 + $0x390] sm:$0xff]
      %v562 = vld [vmem:[%s1 + $0x398] sm:$0xff]
      %v563 = vld [vmem:[%s1 + $0x3a0] sm:$0xff]
      %v564 = vld [vmem:[%s1 + $0x3a8] sm:$0xff]
      %v565 = vld [vmem:[%s1 + $0x3b0] sm:$0xff]
      %v566 = vld [vmem:[%s1 + $0x3b8] sm:$0xff]
      %v567 = vld [vmem:[%s1 + $0x3c0] sm:$0xff]
      %v568 = vld [vmem:[%s1 + $0x3c8] sm:$0xff]
      %v569 = vld [vmem:[%s1 + $0x3d0] sm:$0xff]
      %v570 = vld [vmem:[%s1 + $0x3d8] sm:$0xff]
      %v571 = vld [vmem:[%s1 + $0x3e0] sm:$0xff]
      %v572 = vld [vmem:[%s1 + $0x3e8] sm:$0xff]
      %v573 = vld [vmem:[%s1 + $0x3f0] sm:$0xff]
      %v574 = vld [vmem:[%s1 + $0x3f8] sm:$0xff]
      %v575 = vld [vmem:[%s2] sm:$0x1]
      %576 = vmatpush.msra.mxu0 %v462
      %577 = vmatpush.msra.mxu0 %v461
      %578 = vmatpush.msra.mxu0 %v460
      %579 = vmatpush.msra.mxu0 %v459
      %580 = vmatpush.msra.mxu0 %v458
      %581 = vmatpush.msra.mxu0 %v457
      %582 = vmatpush.msra.mxu0 %v456
      %583 = vmatpush.msra.mxu0 %v455
      %584 = vmatpush.msra.mxu0 %v454
      %585 = vmatpush.msra.mxu0 %v453
      %586 = vmatpush.msra.mxu0 %v452
      %587 = vmatpush.msra.mxu0 %v451
      %588 = vmatpush.msra.mxu0 %v450
      %589 = vmatpush.msra.mxu0 %v449
      %590 = vmatpush.msra.mxu0 %v448
      %591 = vmatpush.msra.mxu0 %v447
      %592 = vmatmul.f32.gmra.mxu0 %v425
      %v593 = vpop.f32.mrf.mxu0
      %v594 = vadd.f32 %v575, %v593
      %595 = vdwg.mxu0
      %596 = vmatpush.msra.mxu0 %v478
      %597 = vmatpush.msra.mxu0 %v477
      %598 = vmatpush.msra.mxu0 %v476
      %599 = vmatpush.msra.mxu0 %v475
      %600 = vmatpush.msra.mxu0 %v474
      %601 = vmatpush.msra.mxu0 %v473
      %602 = vmatpush.msra.mxu0 %v472
      %603 = vmatpush.msra.mxu0 %v471
      %604 = vmatpush.msra.mxu0 %v470
      %605 = vmatpush.msra.mxu0 %v469
      %606 = vmatpush.msra.mxu0 %v468
      %607 = vmatpush.msra.mxu0 %v467
      %608 = vmatpush.msra.mxu0 %v466
      %609 = vmatpush.msra.mxu0 %v465
      %610 = vmatpush.msra.mxu0 %v464
      %611 = vmatpush.msra.mxu0 %v463
      %612 = vmatmul.f32.gmra.mxu0 %v428
      %v613 = vpop.f32.mrf.mxu0
      %v614 = vadd.f32 %v594, %v613
      %615 = vdwg.mxu0
      %616 = vmatpush.msra.mxu0 %v494
      %617 = vmatpush.msra.mxu0 %v493
      %618 = vmatpush.msra.mxu0 %v492
      %619 = vmatpush.msra.mxu0 %v491
      %620 = vmatpush.msra.mxu0 %v490
      %621 = vmatpush.msra.mxu0 %v489
      %622 = vmatpush.msra.mxu0 %v488
      %623 = vmatpush.msra.mxu0 %v487
      %624 = vmatpush.msra.mxu0 %v486
      %625 = vmatpush.msra.mxu0 %v485
      %626 = vmatpush.msra.mxu0 %v484
      %627 = vmatpush.msra.mxu0 %v483
      %628 = vmatpush.msra.mxu0 %v482
      %629 = vmatpush.msra.mxu0 %v481
      %630 = vmatpush.msra.mxu0 %v480
      %631 = vmatpush.msra.mxu0 %v479
      %632 = vmatmul.f32.gmra.mxu0 %v431
      %v633 = vpop.f32.mrf.mxu0
      %v634 = vadd.f32 %v614, %v633
      %635 = vdwg.mxu0
      %636 = vmatpush.msra.mxu0 %v510
      %637 = vmatpush.msra.mxu0 %v509
      %638 = vmatpush.msra.mxu0 %v508
      %639 = vmatpush.msra.mxu0 %v507
      %640 = vmatpush.msra.mxu0 %v506
      %641 = vmatpush.msra.mxu0 %v505
      %642 = vmatpush.msra.mxu0 %v504
      %643 = vmatpush.msra.mxu0 %v503
      %644 = vmatpush.msra.mxu0 %v502
      %645 = vmatpush.msra.mxu0 %v501
      %646 = vmatpush.msra.mxu0 %v500
      %647 = vmatpush.msra.mxu0 %v499
      %648 = vmatpush.msra.mxu0 %v498
      %649 = vmatpush.msra.mxu0 %v497
      %650 = vmatpush.msra.mxu0 %v496
      %651 = vmatpush.msra.mxu0 %v495
      %652 = vmatmul.f32.gmra.mxu0 %v434
      %v653 = vpop.f32.mrf.mxu0
      %v654 = vadd.f32 %v634, %v653
      %655 = vdwg.mxu0
      %656 = vmatpush.msra.mxu0 %v526
      %657 = vmatpush.msra.mxu0 %v525
      %658 = vmatpush.msra.mxu0 %v524
      %659 = vmatpush.msra.mxu0 %v523
      %660 = vmatpush.msra.mxu0 %v522
      %661 = vmatpush.msra.mxu0 %v521
      %662 = vmatpush.msra.mxu0 %v520
      %663 = vmatpush.msra.mxu0 %v519
      %664 = vmatpush.msra.mxu0 %v518
      %665 = vmatpush.msra.mxu0 %v517
      %666 = vmatpush.msra.mxu0 %v516
      %667 = vmatpush.msra.mxu0 %v515
      %668 = vmatpush.msra.mxu0 %v514
      %669 = vmatpush.msra.mxu0 %v513
      %670 = vmatpush.msra.mxu0 %v512
      %671 = vmatpush.msra.mxu0 %v511
      %672 = vmatmul.f32.gmra.mxu0 %v437
      %v673 = vpop.f32.mrf.mxu0
      %v674 = vadd.f32 %v654, %v673
      %675 = vdwg.mxu0
      %676 = vmatpush.msra.mxu0 %v542
      %677 = vmatpush.msra.mxu0 %v541
      %678 = vmatpush.msra.mxu0 %v540
      %679 = vmatpush.msra.mxu0 %v539
      %680 = vmatpush.msra.mxu0 %v538
      %681 = vmatpush.msra.mxu0 %v537
      %682 = vmatpush.msra.mxu0 %v536
      %683 = vmatpush.msra.mxu0 %v535
      %684 = vmatpush.msra.mxu0 %v534
      %685 = vmatpush.msra.mxu0 %v533
      %686 = vmatpush.msra.mxu0 %v532
      %687 = vmatpush.msra.mxu0 %v531
      %688 = vmatpush.msra.mxu0 %v530
      %689 = vmatpush.msra.mxu0 %v529
      %690 = vmatpush.msra.mxu0 %v528
      %691 = vmatpush.msra.mxu0 %v527
      %692 = vmatmul.f32.gmra.mxu0 %v440
      %v693 = vpop.f32.mrf.mxu0
      %v694 = vadd.f32 %v674, %v693
      %695 = vdwg.mxu0
      %696 = vmatpush.msra.mxu0 %v558
      %697 = vmatpush.msra.mxu0 %v557
      %698 = vmatpush.msra.mxu0 %v556
      %699 = vmatpush.msra.mxu0 %v555
      %700 = vmatpush.msra.mxu0 %v554
      %701 = vmatpush.msra.mxu0 %v553
      %702 = vmatpush.msra.mxu0 %v552
      %703 = vmatpush.msra.mxu0 %v551
      %704 = vmatpush.msra.mxu0 %v550
      %705 = vmatpush.msra.mxu0 %v549
      %706 = vmatpush.msra.mxu0 %v548
      %707 = vmatpush.msra.mxu0 %v547
      %708 = vmatpush.msra.mxu0 %v546
      %709 = vmatpush.msra.mxu0 %v545
      %710 = vmatpush.msra.mxu0 %v544
      %711 = vmatpush.msra.mxu0 %v543
      %712 = vmatmul.f32.gmra.mxu0 %v443
      %v713 = vpop.f32.mrf.mxu0
      %v714 = vadd.f32 %v694, %v713
      %715 = vdwg.mxu0
      %716 = vmatpush.msra.mxu0 %v574
      %717 = vmatpush.msra.mxu0 %v573
      %718 = vmatpush.msra.mxu0 %v572
      %719 = vmatpush.msra.mxu0 %v571
      %720 = vmatpush.msra.mxu0 %v570
      %721 = vmatpush.msra.mxu0 %v569
      %722 = vmatpush.msra.mxu0 %v568
      %723 = vmatpush.msra.mxu0 %v567
      %724 = vmatpush.msra.mxu0 %v566
      %725 = vmatpush.msra.mxu0 %v565
      %726 = vmatpush.msra.mxu0 %v564
      %727 = vmatpush.msra.mxu0 %v563
      %728 = vmatpush.msra.mxu0 %v562
      %729 = vmatpush.msra.mxu0 %v561
      %730 = vmatpush.msra.mxu0 %v560
      %731 = vmatpush.msra.mxu0 %v559
      %732 = vmatmul.f32.gmra.mxu0 %v446
      %v733 = vpop.f32.mrf.mxu0
      %v734 = vadd.f32 %v714, %v733
      %735 = vdwg.mxu0
      %v736 = vld [vmem:[%s163] sm:$0xff]
      %v737 = vld [vmem:[%s163 + $0x8] sm:$0xff]
      %v738 = vld [vmem:[%s163 + $0x10] sm:$0xff]
      %v739 = vld [vmem:[%s163 + $0x18] sm:$0xff]
      %744 = vrot.lane.b32.xlu0 %v736, 102
      %v745 = vpop.permute.xlu0 %744
      %746 = vrot.lane.b32.xlu0 %v737, 102
      %v747 = vpop.permute.xlu0 %746
      %748 = vrot.lane.b32.xlu0 %v738, 102
      %v749 = vpop.permute.xlu0 %748
      %750 = vrot.lane.b32.xlu0 %v739, 102
      %v751 = vpop.permute.xlu0 %750
      %v756 = vrot.slane %v745, 4
      %v757 = vsel %vm172, 0.0, %v756
      %v759 = vunpack.c.l.s4 1983009808
      %v760 = vunpack.c.0.s8 %v759
      %v761 = vperm.slane %v745, %v760
      %v763 = vunpack.c.l.s4 1983009808
      %v764 = vunpack.c.0.s8 %v763
      %v765 = vperm.slane %v757, %v764
      %v766 = vrot.slane %v761, 4
      %v767 = vsel %vm172, 0.0, %v766
      %v769 = vunpack.c.l.s4 1934713408
      %v770 = vunpack.c.0.s8 %v769
      %v771 = vperm.slane %v761, %v770
      %v773 = vunpack.c.l.s4 1934713408
      %v774 = vunpack.c.0.s8 %v773
      %v775 = vperm.slane %v767, %v774
      %v776 = vrot.slane %v765, 4
      %v777 = vsel %vm172, 0.0, %v776
      %v779 = vunpack.c.l.s4 1934713408
      %v780 = vunpack.c.0.s8 %v779
      %v781 = vperm.slane %v765, %v780
      %v783 = vunpack.c.l.s4 1934713408
      %v784 = vunpack.c.0.s8 %v783
      %v785 = vperm.slane %v777, %v784
      %v786 = vrot.slane %v771, 4
      %v787 = vsel %vm172, 0.0, %v786
      %v788 = vrot.slane %v775, 4
      %v789 = vsel %vm172, 0.0, %v788
      %v790 = vrot.slane %v781, 4
      %v791 = vsel %vm172, 0.0, %v790
      %v792 = vrot.slane %v785, 4
      %v793 = vsel %vm172, 0.0, %v792
      %v794 = vrot.slane %v747, 4
      %v795 = vsel %vm172, 0.0, %v794
      %v797 = vunpack.c.l.s4 1983009808
      %v798 = vunpack.c.0.s8 %v797
      %v799 = vperm.slane %v747, %v798
      %v801 = vunpack.c.l.s4 1983009808
      %v802 = vunpack.c.0.s8 %v801
      %v803 = vperm.slane %v795, %v802
      %v804 = vrot.slane %v799, 4
      %v805 = vsel %vm172, 0.0, %v804
      %v807 = vunpack.c.l.s4 1934713408
      %v808 = vunpack.c.0.s8 %v807
      %v809 = vperm.slane %v799, %v808
      %v811 = vunpack.c.l.s4 1934713408
      %v812 = vunpack.c.0.s8 %v811
      %v813 = vperm.slane %v805, %v812
      %v814 = vrot.slane %v803, 4
      %v815 = vsel %vm172, 0.0, %v814
      %v817 = vunpack.c.l.s4 1934713408
      %v818 = vunpack.c.0.s8 %v817
      %v819 = vperm.slane %v803, %v818
      %v821 = vunpack.c.l.s4 1934713408
      %v822 = vunpack.c.0.s8 %v821
      %v823 = vperm.slane %v815, %v822
      %v824 = vrot.slane %v809, 4
      %v825 = vsel %vm172, 0.0, %v824
      %v826 = vrot.slane %v813, 4
      %v827 = vsel %vm172, 0.0, %v826
      %v828 = vrot.slane %v819, 4
      %v829 = vsel %vm172, 0.0, %v828
      %v830 = vrot.slane %v823, 4
      %v831 = vsel %vm172, 0.0, %v830
      %v832 = vrot.slane %v749, 4
      %v833 = vsel %vm172, 0.0, %v832
      %v835 = vunpack.c.l.s4 1983009808
      %v836 = vunpack.c.0.s8 %v835
      %v837 = vperm.slane %v749, %v836
      %v839 = vunpack.c.l.s4 1983009808
      %v840 = vunpack.c.0.s8 %v839
      %v841 = vperm.slane %v833, %v840
      %v842 = vrot.slane %v837, 4
      %v843 = vsel %vm172, 0.0, %v842
      %v845 = vunpack.c.l.s4 1934713408
      %v846 = vunpack.c.0.s8 %v845
      %v847 = vperm.slane %v837, %v846
      %v849 = vunpack.c.l.s4 1934713408
      %v850 = vunpack.c.0.s8 %v849
      %v851 = vperm.slane %v843, %v850
      %v852 = vrot.slane %v841, 4
      %v853 = vsel %vm172, 0.0, %v852
      %v855 = vunpack.c.l.s4 1934713408
      %v856 = vunpack.c.0.s8 %v855
      %v857 = vperm.slane %v841, %v856
      %v859 = vunpack.c.l.s4 1934713408
      %v860 = vunpack.c.0.s8 %v859
      %v861 = vperm.slane %v853, %v860
      %v862 = vrot.slane %v847, 4
      %v863 = vsel %vm172, 0.0, %v862
      %v864 = vrot.slane %v851, 4
      %v865 = vsel %vm172, 0.0, %v864
      %v866 = vrot.slane %v857, 4
      %v867 = vsel %vm172, 0.0, %v866
      %v868 = vrot.slane %v861, 4
      %v869 = vsel %vm172, 0.0, %v868
      %v870 = vrot.slane %v751, 4
      %v871 = vsel %vm172, 0.0, %v870
      %v873 = vunpack.c.l.s4 1983009808
      %v874 = vunpack.c.0.s8 %v873
      %v875 = vperm.slane %v751, %v874
      %v877 = vunpack.c.l.s4 1983009808
      %v878 = vunpack.c.0.s8 %v877
      %v879 = vperm.slane %v871, %v878
      %v880 = vrot.slane %v875, 4
      %v881 = vsel %vm172, 0.0, %v880
      %v883 = vunpack.c.l.s4 1934713408
      %v884 = vunpack.c.0.s8 %v883
      %v885 = vperm.slane %v875, %v884
      %v887 = vunpack.c.l.s4 1934713408
      %v888 = vunpack.c.0.s8 %v887
      %v889 = vperm.slane %v881, %v888
      %v890 = vrot.slane %v879, 4
      %v891 = vsel %vm172, 0.0, %v890
      %v893 = vunpack.c.l.s4 1934713408
      %v894 = vunpack.c.0.s8 %v893
      %v895 = vperm.slane %v879, %v894
      %v897 = vunpack.c.l.s4 1934713408
      %v898 = vunpack.c.0.s8 %v897
      %v899 = vperm.slane %v891, %v898
      %v900 = vrot.slane %v885, 4
      %v901 = vsel %vm172, 0.0, %v900
      %v902 = vrot.slane %v889, 4
      %v903 = vsel %vm172, 0.0, %v902
      %v904 = vrot.slane %v895, 4
      %v905 = vsel %vm172, 0.0, %v904
      %v906 = vrot.slane %v899, 4
      %v907 = vsel %vm172, 0.0, %v906
      %909 = vrot.lane.b32.xlu0 %v787, 32
      %v910 = vpop.permute.xlu0 %909
      %913 = vrot.lane.b32.xlu0 %v775, 64
      %v914 = vpop.permute.xlu0 %913
      %917 = vrot.lane.b32.xlu0 %v789, 96
      %v918 = vpop.permute.xlu0 %917
      %921 = vrot.lane.b32.xlu0 %v791, 32
      %v922 = vpop.permute.xlu0 %921
      %925 = vrot.lane.b32.xlu0 %v785, 64
      %v926 = vpop.permute.xlu0 %925
      %929 = vrot.lane.b32.xlu0 %v793, 96
      %v930 = vpop.permute.xlu0 %929
      %933 = vrot.lane.b32.xlu0 %v825, 32
      %v934 = vpop.permute.xlu0 %933
      %937 = vrot.lane.b32.xlu0 %v813, 64
      %v938 = vpop.permute.xlu0 %937
      %941 = vrot.lane.b32.xlu0 %v827, 96
      %v942 = vpop.permute.xlu0 %941
      %945 = vrot.lane.b32.xlu0 %v829, 32
      %v946 = vpop.permute.xlu0 %945
      %949 = vrot.lane.b32.xlu0 %v823, 64
      %v950 = vpop.permute.xlu0 %949
      %953 = vrot.lane.b32.xlu0 %v831, 96
      %v954 = vpop.permute.xlu0 %953
      %957 = vrot.lane.b32.xlu0 %v863, 32
      %v958 = vpop.permute.xlu0 %957
      %961 = vrot.lane.b32.xlu0 %v851, 64
      %v962 = vpop.permute.xlu0 %961
      %965 = vrot.lane.b32.xlu0 %v865, 96
      %v966 = vpop.permute.xlu0 %965
      %969 = vrot.lane.b32.xlu0 %v867, 32
      %v970 = vpop.permute.xlu0 %969
      %973 = vrot.lane.b32.xlu0 %v861, 64
      %v974 = vpop.permute.xlu0 %973
      %977 = vrot.lane.b32.xlu0 %v869, 96
      %v978 = vpop.permute.xlu0 %977
      %981 = vrot.lane.b32.xlu0 %v901, 32
      %v982 = vpop.permute.xlu0 %981
      %985 = vrot.lane.b32.xlu0 %v889, 64
      %v986 = vpop.permute.xlu0 %985
      %989 = vrot.lane.b32.xlu0 %v903, 96
      %v990 = vpop.permute.xlu0 %989
      %993 = vrot.lane.b32.xlu0 %v905, 32
      %v994 = vpop.permute.xlu0 %993
      %997 = vrot.lane.b32.xlu0 %v899, 64
      %v998 = vpop.permute.xlu0 %997
      %1001 = vrot.lane.b32.xlu0 %v907, 96
      %v1002 = vpop.permute.xlu0 %1001
      %v1004 = vsel %vm420, %v771, %v910
      %v1005 = vsel %vm422, %v1004, %v914
      %v1006 = vsel %vm424, %v1005, %v918
      %v1007 = vsel %vm420, %v781, %v922
      %v1008 = vsel %vm422, %v1007, %v926
      %v1009 = vsel %vm424, %v1008, %v930
      %v1010 = vsel %vm420, %v809, %v934
      %v1011 = vsel %vm422, %v1010, %v938
      %v1012 = vsel %vm424, %v1011, %v942
      %v1013 = vsel %vm420, %v819, %v946
      %v1014 = vsel %vm422, %v1013, %v950
      %v1015 = vsel %vm424, %v1014, %v954
      %v1016 = vsel %vm420, %v847, %v958
      %v1017 = vsel %vm422, %v1016, %v962
      %v1018 = vsel %vm424, %v1017, %v966
      %v1019 = vsel %vm420, %v857, %v970
      %v1020 = vsel %vm422, %v1019, %v974
      %v1021 = vsel %vm424, %v1020, %v978
      %v1022 = vsel %vm420, %v885, %v982
      %v1023 = vsel %vm422, %v1022, %v986
      %v1024 = vsel %vm424, %v1023, %v990
      %v1025 = vsel %vm420, %v895, %v994
      %v1026 = vsel %vm422, %v1025, %v998
      %v1027 = vsel %vm424, %v1026, %v1002
      %s1028 = scalar_lea.vmem %s1, 1024
      %v1029 = vld [vmem:[%s1028] sm:$0xff]
      %v1030 = vld [vmem:[%s1028 + $0x8] sm:$0xff]
      %v1031 = vld [vmem:[%s1028 + $0x10] sm:$0xff]
      %v1032 = vld [vmem:[%s1028 + $0x18] sm:$0xff]
      %v1033 = vld [vmem:[%s1028 + $0x20] sm:$0xff]
      %v1034 = vld [vmem:[%s1028 + $0x28] sm:$0xff]
      %v1035 = vld [vmem:[%s1028 + $0x30] sm:$0xff]
      %v1036 = vld [vmem:[%s1028 + $0x38] sm:$0xff]
      %v1037 = vld [vmem:[%s1028 + $0x40] sm:$0xff]
      %v1038 = vld [vmem:[%s1028 + $0x48] sm:$0xff]
      %v1039 = vld [vmem:[%s1028 + $0x50] sm:$0xff]
      %v1040 = vld [vmem:[%s1028 + $0x58] sm:$0xff]
      %v1041 = vld [vmem:[%s1028 + $0x60] sm:$0xff]
      %v1042 = vld [vmem:[%s1028 + $0x68] sm:$0xff]
      %v1043 = vld [vmem:[%s1028 + $0x70] sm:$0xff]
      %v1044 = vld [vmem:[%s1028 + $0x78] sm:$0xff]
      %v1045 = vld [vmem:[%s1028 + $0x80] sm:$0xff]
      %v1046 = vld [vmem:[%s1028 + $0x88] sm:$0xff]
      %v1047 = vld [vmem:[%s1028 + $0x90] sm:$0xff]
      %v1048 = vld [vmem:[%s1028 + $0x98] sm:$0xff]
      %v1049 = vld [vmem:[%s1028 + $0xa0] sm:$0xff]
      %v1050 = vld [vmem:[%s1028 + $0xa8] sm:$0xff]
      %v1051 = vld [vmem:[%s1028 + $0xb0] sm:$0xff]
      %v1052 = vld [vmem:[%s1028 + $0xb8] sm:$0xff]
      %v1053 = vld [vmem:[%s1028 + $0xc0] sm:$0xff]
      %v1054 = vld [vmem:[%s1028 + $0xc8] sm:$0xff]
      %v1055 = vld [vmem:[%s1028 + $0xd0] sm:$0xff]
      %v1056 = vld [vmem:[%s1028 + $0xd8] sm:$0xff]
      %v1057 = vld [vmem:[%s1028 + $0xe0] sm:$0xff]
      %v1058 = vld [vmem:[%s1028 + $0xe8] sm:$0xff]
      %v1059 = vld [vmem:[%s1028 + $0xf0] sm:$0xff]
      %v1060 = vld [vmem:[%s1028 + $0xf8] sm:$0xff]
      %v1061 = vld [vmem:[%s1028 + $0x100] sm:$0xff]
      %v1062 = vld [vmem:[%s1028 + $0x108] sm:$0xff]
      %v1063 = vld [vmem:[%s1028 + $0x110] sm:$0xff]
      %v1064 = vld [vmem:[%s1028 + $0x118] sm:$0xff]
      %v1065 = vld [vmem:[%s1028 + $0x120] sm:$0xff]
      %v1066 = vld [vmem:[%s1028 + $0x128] sm:$0xff]
      %v1067 = vld [vmem:[%s1028 + $0x130] sm:$0xff]
      %v1068 = vld [vmem:[%s1028 + $0x138] sm:$0xff]
      %v1069 = vld [vmem:[%s1028 + $0x140] sm:$0xff]
      %v1070 = vld [vmem:[%s1028 + $0x148] sm:$0xff]
      %v1071 = vld [vmem:[%s1028 + $0x150] sm:$0xff]
      %v1072 = vld [vmem:[%s1028 + $0x158] sm:$0xff]
      %v1073 = vld [vmem:[%s1028 + $0x160] sm:$0xff]
      %v1074 = vld [vmem:[%s1028 + $0x168] sm:$0xff]
      %v1075 = vld [vmem:[%s1028 + $0x170] sm:$0xff]
      %v1076 = vld [vmem:[%s1028 + $0x178] sm:$0xff]
      %v1077 = vld [vmem:[%s1028 + $0x180] sm:$0xff]
      %v1078 = vld [vmem:[%s1028 + $0x188] sm:$0xff]
      %v1079 = vld [vmem:[%s1028 + $0x190] sm:$0xff]
      %v1080 = vld [vmem:[%s1028 + $0x198] sm:$0xff]
      %v1081 = vld [vmem:[%s1028 + $0x1a0] sm:$0xff]
      %v1082 = vld [vmem:[%s1028 + $0x1a8] sm:$0xff]
      %v1083 = vld [vmem:[%s1028 + $0x1b0] sm:$0xff]
      %v1084 = vld [vmem:[%s1028 + $0x1b8] sm:$0xff]
      %v1085 = vld [vmem:[%s1028 + $0x1c0] sm:$0xff]
      %v1086 = vld [vmem:[%s1028 + $0x1c8] sm:$0xff]
      %v1087 = vld [vmem:[%s1028 + $0x1d0] sm:$0xff]
      %v1088 = vld [vmem:[%s1028 + $0x1d8] sm:$0xff]
      %v1089 = vld [vmem:[%s1028 + $0x1e0] sm:$0xff]
      %v1090 = vld [vmem:[%s1028 + $0x1e8] sm:$0xff]
      %v1091 = vld [vmem:[%s1028 + $0x1f0] sm:$0xff]
      %v1092 = vld [vmem:[%s1028 + $0x1f8] sm:$0xff]
      %v1093 = vld [vmem:[%s1028 + $0x200] sm:$0xff]
      %v1094 = vld [vmem:[%s1028 + $0x208] sm:$0xff]
      %v1095 = vld [vmem:[%s1028 + $0x210] sm:$0xff]
      %v1096 = vld [vmem:[%s1028 + $0x218] sm:$0xff]
      %v1097 = vld [vmem:[%s1028 + $0x220] sm:$0xff]
      %v1098 = vld [vmem:[%s1028 + $0x228] sm:$0xff]
      %v1099 = vld [vmem:[%s1028 + $0x230] sm:$0xff]
      %v1100 = vld [vmem:[%s1028 + $0x238] sm:$0xff]
      %v1101 = vld [vmem:[%s1028 + $0x240] sm:$0xff]
      %v1102 = vld [vmem:[%s1028 + $0x248] sm:$0xff]
      %v1103 = vld [vmem:[%s1028 + $0x250] sm:$0xff]
      %v1104 = vld [vmem:[%s1028 + $0x258] sm:$0xff]
      %v1105 = vld [vmem:[%s1028 + $0x260] sm:$0xff]
      %v1106 = vld [vmem:[%s1028 + $0x268] sm:$0xff]
      %v1107 = vld [vmem:[%s1028 + $0x270] sm:$0xff]
      %v1108 = vld [vmem:[%s1028 + $0x278] sm:$0xff]
      %v1109 = vld [vmem:[%s1028 + $0x280] sm:$0xff]
      %v1110 = vld [vmem:[%s1028 + $0x288] sm:$0xff]
      %v1111 = vld [vmem:[%s1028 + $0x290] sm:$0xff]
      %v1112 = vld [vmem:[%s1028 + $0x298] sm:$0xff]
      %v1113 = vld [vmem:[%s1028 + $0x2a0] sm:$0xff]
      %v1114 = vld [vmem:[%s1028 + $0x2a8] sm:$0xff]
      %v1115 = vld [vmem:[%s1028 + $0x2b0] sm:$0xff]
      %v1116 = vld [vmem:[%s1028 + $0x2b8] sm:$0xff]
      %v1117 = vld [vmem:[%s1028 + $0x2c0] sm:$0xff]
      %v1118 = vld [vmem:[%s1028 + $0x2c8] sm:$0xff]
      %v1119 = vld [vmem:[%s1028 + $0x2d0] sm:$0xff]
      %v1120 = vld [vmem:[%s1028 + $0x2d8] sm:$0xff]
      %v1121 = vld [vmem:[%s1028 + $0x2e0] sm:$0xff]
      %v1122 = vld [vmem:[%s1028 + $0x2e8] sm:$0xff]
      %v1123 = vld [vmem:[%s1028 + $0x2f0] sm:$0xff]
      %v1124 = vld [vmem:[%s1028 + $0x2f8] sm:$0xff]
      %v1125 = vld [vmem:[%s1028 + $0x300] sm:$0xff]
      %v1126 = vld [vmem:[%s1028 + $0x308] sm:$0xff]
      %v1127 = vld [vmem:[%s1028 + $0x310] sm:$0xff]
      %v1128 = vld [vmem:[%s1028 + $0x318] sm:$0xff]
      %v1129 = vld [vmem:[%s1028 + $0x320] sm:$0xff]
      %v1130 = vld [vmem:[%s1028 + $0x328] sm:$0xff]
      %v1131 = vld [vmem:[%s1028 + $0x330] sm:$0xff]
      %v1132 = vld [vmem:[%s1028 + $0x338] sm:$0xff]
      %v1133 = vld [vmem:[%s1028 + $0x340] sm:$0xff]
      %v1134 = vld [vmem:[%s1028 + $0x348] sm:$0xff]
      %v1135 = vld [vmem:[%s1028 + $0x350] sm:$0xff]
      %v1136 = vld [vmem:[%s1028 + $0x358] sm:$0xff]
      %v1137 = vld [vmem:[%s1028 + $0x360] sm:$0xff]
      %v1138 = vld [vmem:[%s1028 + $0x368] sm:$0xff]
      %v1139 = vld [vmem:[%s1028 + $0x370] sm:$0xff]
      %v1140 = vld [vmem:[%s1028 + $0x378] sm:$0xff]
      %v1141 = vld [vmem:[%s1028 + $0x380] sm:$0xff]
      %v1142 = vld [vmem:[%s1028 + $0x388] sm:$0xff]
      %v1143 = vld [vmem:[%s1028 + $0x390] sm:$0xff]
      %v1144 = vld [vmem:[%s1028 + $0x398] sm:$0xff]
      %v1145 = vld [vmem:[%s1028 + $0x3a0] sm:$0xff]
      %v1146 = vld [vmem:[%s1028 + $0x3a8] sm:$0xff]
      %v1147 = vld [vmem:[%s1028 + $0x3b0] sm:$0xff]
      %v1148 = vld [vmem:[%s1028 + $0x3b8] sm:$0xff]
      %v1149 = vld [vmem:[%s1028 + $0x3c0] sm:$0xff]
      %v1150 = vld [vmem:[%s1028 + $0x3c8] sm:$0xff]
      %v1151 = vld [vmem:[%s1028 + $0x3d0] sm:$0xff]
      %v1152 = vld [vmem:[%s1028 + $0x3d8] sm:$0xff]
      %v1153 = vld [vmem:[%s1028 + $0x3e0] sm:$0xff]
      %v1154 = vld [vmem:[%s1028 + $0x3e8] sm:$0xff]
      %v1155 = vld [vmem:[%s1028 + $0x3f0] sm:$0xff]
      %v1156 = vld [vmem:[%s1028 + $0x3f8] sm:$0xff]
      %v1157 = vld [vmem:[%s2 + $0x1] sm:$0x1]
      %1158 = vmatpush.msra.mxu0 %v1044
      %1159 = vmatpush.msra.mxu0 %v1043
      %1160 = vmatpush.msra.mxu0 %v1042
      %1161 = vmatpush.msra.mxu0 %v1041
      %1162 = vmatpush.msra.mxu0 %v1040
      %1163 = vmatpush.msra.mxu0 %v1039
      %1164 = vmatpush.msra.mxu0 %v1038
      %1165 = vmatpush.msra.mxu0 %v1037
      %1166 = vmatpush.msra.mxu0 %v1036
      %1167 = vmatpush.msra.mxu0 %v1035
      %1168 = vmatpush.msra.mxu0 %v1034
      %1169 = vmatpush.msra.mxu0 %v1033
      %1170 = vmatpush.msra.mxu0 %v1032
      %1171 = vmatpush.msra.mxu0 %v1031
      %1172 = vmatpush.msra.mxu0 %v1030
      %1173 = vmatpush.msra.mxu0 %v1029
      %1174 = vmatmul.f32.gmra.mxu0 %v1006
      %v1175 = vpop.f32.mrf.mxu0
      %v1176 = vadd.f32 %v1157, %v1175
      %1177 = vdwg.mxu0
      %1178 = vmatpush.msra.mxu0 %v1060
      %1179 = vmatpush.msra.mxu0 %v1059
      %1180 = vmatpush.msra.mxu0 %v1058
      %1181 = vmatpush.msra.mxu0 %v1057
      %1182 = vmatpush.msra.mxu0 %v1056
      %1183 = vmatpush.msra.mxu0 %v1055
      %1184 = vmatpush.msra.mxu0 %v1054
      %1185 = vmatpush.msra.mxu0 %v1053
      %1186 = vmatpush.msra.mxu0 %v1052
      %1187 = vmatpush.msra.mxu0 %v1051
      %1188 = vmatpush.msra.mxu0 %v1050
      %1189 = vmatpush.msra.mxu0 %v1049
      %1190 = vmatpush.msra.mxu0 %v1048
      %1191 = vmatpush.msra.mxu0 %v1047
      %1192 = vmatpush.msra.mxu0 %v1046
      %1193 = vmatpush.msra.mxu0 %v1045
      %1194 = vmatmul.f32.gmra.mxu0 %v1009
      %v1195 = vpop.f32.mrf.mxu0
      %v1196 = vadd.f32 %v1176, %v1195
      %1197 = vdwg.mxu0
      %1198 = vmatpush.msra.mxu0 %v1076
      %1199 = vmatpush.msra.mxu0 %v1075
      %1200 = vmatpush.msra.mxu0 %v1074
      %1201 = vmatpush.msra.mxu0 %v1073
      %1202 = vmatpush.msra.mxu0 %v1072
      %1203 = vmatpush.msra.mxu0 %v1071
      %1204 = vmatpush.msra.mxu0 %v1070
      %1205 = vmatpush.msra.mxu0 %v1069
      %1206 = vmatpush.msra.mxu0 %v1068
      %1207 = vmatpush.msra.mxu0 %v1067
      %1208 = vmatpush.msra.mxu0 %v1066
      %1209 = vmatpush.msra.mxu0 %v1065
      %1210 = vmatpush.msra.mxu0 %v1064
      %1211 = vmatpush.msra.mxu0 %v1063
      %1212 = vmatpush.msra.mxu0 %v1062
      %1213 = vmatpush.msra.mxu0 %v1061
      %1214 = vmatmul.f32.gmra.mxu0 %v1012
      %v1215 = vpop.f32.mrf.mxu0
      %v1216 = vadd.f32 %v1196, %v1215
      %1217 = vdwg.mxu0
      %1218 = vmatpush.msra.mxu0 %v1092
      %1219 = vmatpush.msra.mxu0 %v1091
      %1220 = vmatpush.msra.mxu0 %v1090
      %1221 = vmatpush.msra.mxu0 %v1089
      %1222 = vmatpush.msra.mxu0 %v1088
      %1223 = vmatpush.msra.mxu0 %v1087
      %1224 = vmatpush.msra.mxu0 %v1086
      %1225 = vmatpush.msra.mxu0 %v1085
      %1226 = vmatpush.msra.mxu0 %v1084
      %1227 = vmatpush.msra.mxu0 %v1083
      %1228 = vmatpush.msra.mxu0 %v1082
      %1229 = vmatpush.msra.mxu0 %v1081
      %1230 = vmatpush.msra.mxu0 %v1080
      %1231 = vmatpush.msra.mxu0 %v1079
      %1232 = vmatpush.msra.mxu0 %v1078
      %1233 = vmatpush.msra.mxu0 %v1077
      %1234 = vmatmul.f32.gmra.mxu0 %v1015
      %v1235 = vpop.f32.mrf.mxu0
      %v1236 = vadd.f32 %v1216, %v1235
      %1237 = vdwg.mxu0
      %1238 = vmatpush.msra.mxu0 %v1108
      %1239 = vmatpush.msra.mxu0 %v1107
      %1240 = vmatpush.msra.mxu0 %v1106
      %1241 = vmatpush.msra.mxu0 %v1105
      %1242 = vmatpush.msra.mxu0 %v1104
      %1243 = vmatpush.msra.mxu0 %v1103
      %1244 = vmatpush.msra.mxu0 %v1102
      %1245 = vmatpush.msra.mxu0 %v1101
      %1246 = vmatpush.msra.mxu0 %v1100
      %1247 = vmatpush.msra.mxu0 %v1099
      %1248 = vmatpush.msra.mxu0 %v1098
      %1249 = vmatpush.msra.mxu0 %v1097
      %1250 = vmatpush.msra.mxu0 %v1096
      %1251 = vmatpush.msra.mxu0 %v1095
      %1252 = vmatpush.msra.mxu0 %v1094
      %1253 = vmatpush.msra.mxu0 %v1093
      %1254 = vmatmul.f32.gmra.mxu0 %v1018
      %v1255 = vpop.f32.mrf.mxu0
      %v1256 = vadd.f32 %v1236, %v1255
      %1257 = vdwg.mxu0
      %1258 = vmatpush.msra.mxu0 %v1124
      %1259 = vmatpush.msra.mxu0 %v1123
      %1260 = vmatpush.msra.mxu0 %v1122
      %1261 = vmatpush.msra.mxu0 %v1121
      %1262 = vmatpush.msra.mxu0 %v1120
      %1263 = vmatpush.msra.mxu0 %v1119
      %1264 = vmatpush.msra.mxu0 %v1118
      %1265 = vmatpush.msra.mxu0 %v1117
      %1266 = vmatpush.msra.mxu0 %v1116
      %1267 = vmatpush.msra.mxu0 %v1115
      %1268 = vmatpush.msra.mxu0 %v1114
      %1269 = vmatpush.msra.mxu0 %v1113
      %1270 = vmatpush.msra.mxu0 %v1112
      %1271 = vmatpush.msra.mxu0 %v1111
      %1272 = vmatpush.msra.mxu0 %v1110
      %1273 = vmatpush.msra.mxu0 %v1109
      %1274 = vmatmul.f32.gmra.mxu0 %v1021
      %v1275 = vpop.f32.mrf.mxu0
      %v1276 = vadd.f32 %v1256, %v1275
      %1277 = vdwg.mxu0
      %1278 = vmatpush.msra.mxu0 %v1140
      %1279 = vmatpush.msra.mxu0 %v1139
      %1280 = vmatpush.msra.mxu0 %v1138
      %1281 = vmatpush.msra.mxu0 %v1137
      %1282 = vmatpush.msra.mxu0 %v1136
      %1283 = vmatpush.msra.mxu0 %v1135
      %1284 = vmatpush.msra.mxu0 %v1134
      %1285 = vmatpush.msra.mxu0 %v1133
      %1286 = vmatpush.msra.mxu0 %v1132
      %1287 = vmatpush.msra.mxu0 %v1131
      %1288 = vmatpush.msra.mxu0 %v1130
      %1289 = vmatpush.msra.mxu0 %v1129
      %1290 = vmatpush.msra.mxu0 %v1128
      %1291 = vmatpush.msra.mxu0 %v1127
      %1292 = vmatpush.msra.mxu0 %v1126
      %1293 = vmatpush.msra.mxu0 %v1125
      %1294 = vmatmul.f32.gmra.mxu0 %v1024
      %v1295 = vpop.f32.mrf.mxu0
      %v1296 = vadd.f32 %v1276, %v1295
      %1297 = vdwg.mxu0
      %1298 = vmatpush.msra.mxu0 %v1156
      %1299 = vmatpush.msra.mxu0 %v1155
      %1300 = vmatpush.msra.mxu0 %v1154
      %1301 = vmatpush.msra.mxu0 %v1153
      %1302 = vmatpush.msra.mxu0 %v1152
      %1303 = vmatpush.msra.mxu0 %v1151
      %1304 = vmatpush.msra.mxu0 %v1150
      %1305 = vmatpush.msra.mxu0 %v1149
      %1306 = vmatpush.msra.mxu0 %v1148
      %1307 = vmatpush.msra.mxu0 %v1147
      %1308 = vmatpush.msra.mxu0 %v1146
      %1309 = vmatpush.msra.mxu0 %v1145
      %1310 = vmatpush.msra.mxu0 %v1144
      %1311 = vmatpush.msra.mxu0 %v1143
      %1312 = vmatpush.msra.mxu0 %v1142
      %1313 = vmatpush.msra.mxu0 %v1141
      %1314 = vmatmul.f32.gmra.mxu0 %v1027
      %v1315 = vpop.f32.mrf.mxu0
      %v1316 = vadd.f32 %v1296, %v1315
      %1317 = vdwg.mxu0
      %1319 = vrot.lane.b32.xlu0 %v1316, 4
      %v1320 = vpop.permute.xlu0 %1319
      %vm1322 = vcmask 31744
      %v1323 = vsel %vm1322, %v734, %v1320
      %vm1324 = vcmask 57344
      %1325 = vst.msk [vmem:[%s166] sm:$0x1] %vm1324, %v1323
      %p1326 = scmp.lt.s32.totalorder %s14, 1
      %s1327 = scalar_select %p1326, %s14, 1
      %s1328 = scalar_lea.vmem %s3, %s1327
      // Predicated region
      $region33: #{encode32_forward.1} parent=31 // pred_check
        %p1329 = pneg %p100
      $region34: #{encode32_forward.1} parent=31 // pred_check_branch
        %1331 = sbr.rel (%p1329) target = $region36
      $region35: #{encode32_forward.1} parent=31 // pred_region
        _
      $region36: #{encode32_forward.1} parent=31 // pred_fallthru
        _
    $region32: #{encode32_forward.1} parent=5 // pred_fallthru
      _
    %p1332 = scmp.le.s32.totalorder 2, %s9
    // Predicated region
    $region37: #{encode32_forward.1} parent=5 // pred_check
      %p1333 = pneg %p1332
    $region38: #{encode32_forward.1} parent=5 // pred_check_branch
      %1335 = sbr.rel (%p1333) target = $region40
    $region39: #{encode32_forward.1} parent=5 // pred_region
      %s1336 = ssub.s32 %s9, 2
      // Predicated region
      $region41: #{encode32_forward.1} parent=39 // pred_check
        %p1337 = pneg %p106
      $region42: #{encode32_forward.1} parent=39 // pred_check_branch
        %1339 = sbr.rel (%p1337) target = $region44
      $region43: #{encode32_forward.1} parent=39 // pred_region
        %p1340 = scmp.lt.s32.totalorder %s15, 1
        %s1341 = scalar_select %p1340, %s15, 1
        %s1342 = scalar_lea.vmem %s3, %s1341
      $region44: #{encode32_forward.1} parent=39 // pred_fallthru
        _
    $region40: #{encode32_forward.1} parent=5 // pred_fallthru
      _
  $region6: #{encode32_forward.1} parent=0 // loop_footer
    %s13 = sadd.s32 1, %s9
  $region7: #{encode32_forward.1} parent=0 // loop_footer_branch
    %8 = sbr.rel target = $region3
  $region8: #{encode32_forward.1} parent=0 // loop_exit
    _

</llo_original>
